<compile_context>
chip_gen: v6e
topology: v6e:2x2x1
jax: 0.10.0
libtpu: 0.0.40
codegen_flags: <defaults>
</compile_context>

<pallas_src>
import jax
import jax.numpy as jnp
from jax.experimental import pallas as pl
from jax.experimental.pallas import tpu as pltpu


_LANES = 128
_SUBLANES = 8


def _round_up(x, m):
    return (x + m - 1) // m * m


def _tpu_budget():
    """Pick (max_tile_rows, vmem_limit_bytes) for the current TPU generation."""
    # Safe everywhere (incl. v7x with 64 MiB physical VMEM per TensorCore):
    # 8192 rows * 128 lanes * 4 B = 4 MiB per input block, 2 inputs x 2 bufs.
    max_tile_rows, vmem_limit = 8192, 48 << 20
    try:
        info = pltpu.get_tpu_info()
        vmem = getattr(info, "vmem_capacity_bytes", None)
        if vmem is not None and int(vmem) >= (96 << 20):
            # v5e / v6e: 128 MiB physical VMEM -> 8 MiB blocks halve the
            # per-step overhead share; explicit limit overrides v5e's 16 MiB
            # scoped-VMEM default.
            max_tile_rows, vmem_limit = 16384, 80 << 20
    except Exception:
        pass
    return max_tile_rows, vmem_limit


def _iou_kernel(pred_ref, targ_ref, out_ref):
    """Accumulate per-(core-slot, batch) (2, 8, 128) partial sums.

    out_ref[0] += partials of sum(target * pred)
    out_ref[1] += partials of sum(target) + sum(pred)
    """
    t_idx = pl.program_id(2)

    @pl.when(t_idx == 0)
    def _init():
        out_ref[...] = jnp.zeros_like(out_ref)

    tile_rows = pred_ref.shape[0]
    n_chunks = tile_rows // _SUBLANES

    if n_chunks == 1:
        p = pred_ref[...].astype(jnp.float32)
        t = targ_ref[...].astype(jnp.float32)
        prod8 = t * p
        both8 = t + p
    else:
        # Stream (8,128) chunks straight from VMEM refs into two vreg-sized
        # accumulators: temporaries stay at a few vregs, kernel stays DMA-bound.
        def body(i, carry):
            prod_acc, both_acc = carry
            r = pl.multiple_of(i * _SUBLANES, _SUBLANES)
            p = pred_ref[pl.ds(r, _SUBLANES), :].astype(jnp.float32)
            t = targ_ref[pl.ds(r, _SUBLANES), :].astype(jnp.float32)
            return prod_acc + t * p, both_acc + (t + p)

        zero = jnp.zeros((_SUBLANES, _LANES), jnp.float32)
        prod8, both8 = jax.lax.fori_loop(
            0, n_chunks, body, (zero, zero), unroll=min(8, n_chunks)
        )

    out_ref[0] += prod8
    out_ref[1] += both8


def iou_loss(pred, target):
    """Pallas implementation of _iou(pred, target). pred/target: (B, C, H, W)."""
    assert pred.shape == target.shape
    B = pred.shape[0]
    n = 1
    for d in pred.shape[1:]:
        n *= int(d)

    # Accumulate in f32; also keeps the (8,128) sublane granularity assumption.
    # TODO(synk): bf16 inputs would want (16,128) chunk granularity instead of a cast.
    if pred.dtype != jnp.float32:
        pred = pred.astype(jnp.float32)
    if target.dtype != jnp.float32:
        target = target.astype(jnp.float32)

    max_tile_rows, vmem_limit = _tpu_budget()

    pred_flat = pred.reshape(B, n)
    targ_flat = target.reshape(B, n)

    # Lane-align (and make at least one (8,128) tile). For n % 128 == 0 and
    # n >= 1024 this is a no-op -> zero-copy reshape path.
    n_aligned = max(_round_up(n, _LANES), _SUBLANES * _LANES)
    if n_aligned != n:
        # Minimal, sum-neutral zero pad (only copying path; lane-ragged inputs
        # cannot be presented lane-dense to the kernel without a copy).
        pad = ((0, 0), (0, n_aligned - n))
        pred_flat = jnp.pad(pred_flat, pad)
        targ_flat = jnp.pad(targ_flat, pad)

    rows = n_aligned // _LANES                                  # >= 8
    num_tiles = pl.cdiv(rows, max_tile_rows)
    # Balanced tiles, rounded DOWN to the sublane granule; the small remainder
    # (< 8 * num_tiles rows) is summed in the JAX epilogue instead of padding.
    tile_rows = (rows // num_tiles) // _SUBLANES * _SUBLANES    # >= 8
    core_split = 2 if (num_tiles % 2 == 0) else 1
    tiles_per_core = num_tiles // core_split
    rows_main = num_tiles * tile_rows                           # <= rows

    pred_r = pred_flat.reshape(B, rows, _LANES)
    targ_r = targ_flat.reshape(B, rows, _LANES)

    in_spec = pl.BlockSpec(
        (pl.Squeezed(), tile_rows, _LANES),
        lambda c, b, t: (b, c * tiles_per_core + t, 0),
    )
    out_spec = pl.BlockSpec(
        (pl.Squeezed(), 2, _SUBLANES, _LANES),
        lambda c, b, t: (c * B + b, 0, 0, 0),
    )

    out_bytes = core_split * B * 2 * _SUBLANES * _LANES * 4
    cost = pl.CostEstimate(
        flops=3 * B * rows_main * _LANES,
        transcendentals=0,
        bytes_accessed=2 * B * rows_main * _LANES * 4 + out_bytes,
    )

    partials = pl.pallas_call(
        _iou_kernel,
        out_shape=jax.ShapeDtypeStruct(
            (core_split * B, 2, _SUBLANES, _LANES), jnp.float32
        ),
        grid_spec=pltpu.PrefetchScalarGridSpec(
            num_scalar_prefetch=0,
            grid=(core_split, B, tiles_per_core),
            in_specs=[in_spec, in_spec],
            out_specs=out_spec,
        ),
        compiler_params=pltpu.CompilerParams(
            dimension_semantics=("parallel", "parallel", "arbitrary"),
            vmem_limit_bytes=vmem_limit,
        ),
        cost_estimate=cost,
    )(pred_r, targ_r)

    # Tiny O(B) epilogue: finish reductions (cross-lane/sublane/core-slot),
    # fold the unbalanced row tail, and form the loss.
    sums = jnp.sum(
        partials.reshape(core_split, B, 2, _SUBLANES, _LANES), axis=(0, 3, 4)
    )  # (B, 2)
    iand = sums[:, 0]
    sum_pt = sums[:, 1]
    if rows_main < rows:
        p_tail = pred_r[:, rows_main:, :]
        t_tail = targ_r[:, rows_main:, :]
        iand = iand + jnp.sum(t_tail * p_tail, axis=(1, 2))
        sum_pt = sum_pt + jnp.sum(t_tail + p_tail, axis=(1, 2))
    ior = sum_pt - iand
    return jnp.mean(1.0 - iand / ior)


def _iou_ref(pred, target):
    # Pure-JAX reference mirroring the PyTorch per-batch loop.
    iand = jnp.sum(target * pred, axis=(1, 2, 3))
    ior = jnp.sum(target, axis=(1, 2, 3)) + jnp.sum(pred, axis=(1, 2, 3)) - iand
    return jnp.mean(1.0 - iand / ior)


if __name__ == "__main__":
    key = jax.random.PRNGKey(0)
    k1, k2 = jax.random.split(key)
    B, C, H, W = 2, 4, 16, 16
    # positive "probability-like" inputs, as typical for an IoU loss
    pred = jax.nn.sigmoid(jax.random.normal(k1, (B, C, H, W), dtype=jnp.float32))
    target = (jax.random.uniform(k2, (B, C, H, W)) > 0.5).astype(jnp.float32)

    loss = iou_loss(pred, target)
    jax.block_until_ready(loss)

    ref = _iou_ref(pred, target)
    assert jnp.allclose(loss, ref, rtol=1e-5, atol=1e-5), (loss, ref)
    print("KERNEL_OK")
</pallas_src>

<mosaic_0001>
module attributes {stable_mosaic.version = 11 : i64} {
  func.func @_iou_kernel(%arg0: i32, %arg1: i32, %arg2: i32, %arg3: memref<1x8x128xf32, #tpu.memory_space<vmem>>, %arg4: memref<1x8x128xf32, #tpu.memory_space<vmem>>, %arg5: memref<1x2x8x128xf32, #tpu.memory_space<vmem>>) attributes {dimension_semantics = [#tpu.dimension_semantics<parallel>, #tpu.dimension_semantics<parallel>, #tpu.dimension_semantics<arbitrary>], iteration_bounds = array<i64: 1, 2, 1>, scalar_prefetch = 0 : i64, scratch_operands = 0 : i64, tpu.core_type = #tpu.core_type<tc>, window_params = [{transform_indices = @transform_0, window_bounds = array<i64: 1, 8, 128>}, {transform_indices = @transform_1, window_bounds = array<i64: 1, 8, 128>}, {transform_indices = @transform_2, window_bounds = array<i64: 1, 2, 8, 128>}]} {
    %c0_i32 = arith.constant 0 : i32
    %0 = arith.cmpi eq, %arg2, %c0_i32 : i32
    %1 = arith.extui %0 : i1 to i32
    %c0_i32_0 = arith.constant 0 : i32
    %2 = arith.cmpi ne, %1, %c0_i32_0 : i32
    scf.if %2 {
      %cst = arith.constant 0.000000e+00 : f32
      %21 = vector.broadcast %cst : f32 to vector<2x8x128xf32>
      %c0_21 = arith.constant 0 : index
      %c0_22 = arith.constant 0 : index
      %c0_23 = arith.constant 0 : index
      %c0_24 = arith.constant 0 : index
      %22 = vector.load %arg5[%c0_21, %c0_22, %c0_23, %c0_24] : memref<1x2x8x128xf32, #tpu.memory_space<vmem>>, vector<1x2x8x128xf32>
      %23 = vector.shape_cast %22 : vector<1x2x8x128xf32> to vector<2x8x128xf32>
      %24 = vector.shape_cast %21 : vector<2x8x128xf32> to vector<1x2x8x128xf32>
      tpu.vector_store %arg5[%c0_21, %c0_22, %c0_23, %c0_24], %24 {strides = array<i32>} : memref<1x2x8x128xf32, #tpu.memory_space<vmem>>, vector<1x2x8x128xf32>,
    } else {
    }
    %c0 = arith.constant 0 : index
    %c0_1 = arith.constant 0 : index
    %c0_2 = arith.constant 0 : index
    %3 = vector.load %arg3[%c0, %c0_1, %c0_2] : memref<1x8x128xf32, #tpu.memory_space<vmem>>, vector<1x8x128xf32>
    %4 = vector.shape_cast %3 : vector<1x8x128xf32> to vector<8x128xf32>
    %c0_3 = arith.constant 0 : index
    %c0_4 = arith.constant 0 : index
    %c0_5 = arith.constant 0 : index
    %5 = vector.load %arg4[%c0_3, %c0_4, %c0_5] : memref<1x8x128xf32, #tpu.memory_space<vmem>>, vector<1x8x128xf32>
    %6 = vector.shape_cast %5 : vector<1x8x128xf32> to vector<8x128xf32>
    %7 = arith.mulf %6, %4 : vector<8x128xf32>
    %8 = arith.addf %6, %4 : vector<8x128xf32>
    %c0_6 = arith.constant 0 : index
    %c0_7 = arith.constant 0 : index
    %c0_8 = arith.constant 0 : index
    %c0_9 = arith.constant 0 : index
    %9 = vector.load %arg5[%c0_6, %c0_7, %c0_8, %c0_9] : memref<1x2x8x128xf32, #tpu.memory_space<vmem>>, vector<1x1x8x128xf32>
    %10 = vector.shape_cast %9 : vector<1x1x8x128xf32> to vector<8x128xf32>
    %11 = arith.addf %10, %7 : vector<8x128xf32>
    %c0_10 = arith.constant 0 : index
    %c0_11 = arith.constant 0 : index
    %c0_12 = arith.constant 0 : index
    %c0_13 = arith.constant 0 : index
    %12 = vector.load %arg5[%c0_10, %c0_11, %c0_12, %c0_13] : memref<1x2x8x128xf32, #tpu.memory_space<vmem>>, vector<1x1x8x128xf32>
    %13 = vector.shape_cast %12 : vector<1x1x8x128xf32> to vector<8x128xf32>
    %14 = vector.shape_cast %11 : vector<8x128xf32> to vector<1x1x8x128xf32>
    tpu.vector_store %arg5[%c0_10, %c0_11, %c0_12, %c0_13], %14 {strides = array<i32>} : memref<1x2x8x128xf32, #tpu.memory_space<vmem>>, vector<1x1x8x128xf32>,
    %c0_14 = arith.constant 0 : index
    %c1 = arith.constant 1 : index
    %c0_15 = arith.constant 0 : index
    %c0_16 = arith.constant 0 : index
    %15 = vector.load %arg5[%c0_14, %c1, %c0_15, %c0_16] : memref<1x2x8x128xf32, #tpu.memory_space<vmem>>, vector<1x1x8x128xf32>
    %16 = vector.shape_cast %15 : vector<1x1x8x128xf32> to vector<8x128xf32>
    %17 = arith.addf %16, %8 : vector<8x128xf32>
    %c0_17 = arith.constant 0 : index
    %c1_18 = arith.constant 1 : index
    %c0_19 = arith.constant 0 : index
    %c0_20 = arith.constant 0 : index
    %18 = vector.load %arg5[%c0_17, %c1_18, %c0_19, %c0_20] : memref<1x2x8x128xf32, #tpu.memory_space<vmem>>, vector<1x1x8x128xf32>
    %19 = vector.shape_cast %18 : vector<1x1x8x128xf32> to vector<8x128xf32>
    %20 = vector.shape_cast %17 : vector<8x128xf32> to vector<1x1x8x128xf32>
    tpu.vector_store %arg5[%c0_17, %c1_18, %c0_19, %c0_20], %20 {strides = array<i32>} : memref<1x2x8x128xf32, #tpu.memory_space<vmem>>, vector<1x1x8x128xf32>,
    return
  }
  func.func @transform_0(%arg0: i32, %arg1: i32, %arg2: i32) -> (i32, i32, i32) {
    %c1_i32 = arith.constant 1 : i32
    %0 = arith.muli %arg0, %c1_i32 : i32
    %1 = arith.addi %0, %arg2 : i32
    %c0_i32 = arith.constant 0 : i32
    %c0_i32_0 = arith.constant 0 : i32
    return %arg1, %1, %c0_i32 : i32, i32, i32
  }
  func.func @transform_1(%arg0: i32, %arg1: i32, %arg2: i32) -> (i32, i32, i32) {
    %c1_i32 = arith.constant 1 : i32
    %0 = arith.muli %arg0, %c1_i32 : i32
    %1 = arith.addi %0, %arg2 : i32
    %c0_i32 = arith.constant 0 : i32
    %c0_i32_0 = arith.constant 0 : i32
    return %arg1, %1, %c0_i32 : i32, i32, i32
  }
  func.func @transform_2(%arg0: i32, %arg1: i32, %arg2: i32) -> (i32, i32, i32, i32) {
    %c2_i32 = arith.constant 2 : i32
    %0 = arith.muli %arg0, %c2_i32 : i32
    %1 = arith.addi %0, %arg1 : i32
    %c0_i32 = arith.constant 0 : i32
    %c0_i32_0 = arith.constant 0 : i32
    %c0_i32_1 = arith.constant 0 : i32
    %c0_i32_2 = arith.constant 0 : i32
    return %1, %c0_i32, %c0_i32_0, %c0_i32_1 : i32, i32, i32, i32
  }
}

</mosaic_0001>

<llo_original>
// kernel: tpu_custom_call.1
$region0: #{tpu_custom_call.1}
  #allocation0 [shape = 'u32[]', space=smem, size = 0x4, offset = 0x4, fixed_abs, tag = 'smem constant byte address 0x4 - core index']
  #allocation1 [shape = 'u32[144,128]{1,0:T(1,128)}', space=vmem, size = 0x12000, scoped, tag = 'internal scratch']
  %s0 = inlined_call_operand.hbm [shape: f32[2,8,128], index: 0, kind: input, shape index: {}]
  %s1 = inlined_call_operand.hbm [shape: f32[2,8,128], index: 1, kind: input, shape index: {}]
  %s2 = inlined_call_operand.hbm [shape: f32[2,2,8,128], index: 2, kind: output, shape index: {}]
  %s3 = sld [smem:[#allocation0]]
  $region53: #{tpu_custom_call.1} parent=0
    _
  %s5 = ssub.s32 1, %s3
  %s6 = scalar_select 0, %s5, %s3
  $region1: #{tpu_custom_call.1} parent=0
    #allocation2 [shape = 'u8[8192]{0}', space=vmem, size = 0x2000, scoped, tag = 'input window, operand 0']
    #allocation3 [shape = 's32[2]{0}', space=sflag, size = 0x8, scoped, tag = 'scoped memory for tpu_custom_call.1']
    #allocation4 [shape = 's32[2]{0}', space=sflag, size = 0x8, scoped, tag = 'scoped memory for tpu_custom_call.1']
    #allocation5 [shape = 'u8[8192]{0}', space=vmem, size = 0x2000, scoped, tag = 'input window, operand 1']
    #allocation6 [shape = 's32[2]{0}', space=sflag, size = 0x8, scoped, tag = 'scoped memory for tpu_custom_call.1']
    #allocation7 [shape = 'u8[16384]{0}', space=vmem, size = 0x4000, scoped, tag = 'output window, operand 0']
    %7 = vsyncpa [#allocation3], 0
    %s8 = scalar_lea.sflag [#allocation3], 1
    %9 = vsyncpa %s8, 0
    %10 = vsyncpa [#allocation6], 0
    %s11 = scalar_lea.sflag [#allocation6], 1
    %12 = vsyncpa %s11, 0
    %13 = vsyncpa [#allocation4], 0
    %s14 = scalar_lea.sflag [#allocation4], 1
    %15 = vsyncpa %s14, 0
    loop: start=0, step=1, limit=4
    $region2: #{tpu_custom_call.1} parent=1 // loop_pre_header
      _
    $region3: #{tpu_custom_call.1} parent=1 // loop_header
      %s17 = sphi 0, %s21
      %p18 = scmp.ge.s32.totalorder %s17, 4
      %s24 = sphi 0, %s43
      %s25 = sphi 0, %s39
      %s26 = sphi 0, %s35
      %s27 = sphi 0, %s24
      %s28 = sphi 0, %s25
      %s29 = sphi 0, %s26
      %s30 = sphi 0, %s27
      %s31 = sphi 0, %s28
      %s32 = sphi 0, %s29
      %s50 = sphi 0, %s52
      %s53 = sphi 0, %s50
      %s54 = sphi 0, %s53
      %s70 = sphi 0, %s54
      %s80 = sphi 0, %s82
      %s83 = sphi 0, %s80
      %s84 = sphi 0, %s83
      %s100 = sphi 0, %s84
      %s110 = sphi 0, %s112
      %s113 = sphi 0, %s110
      %s114 = sphi 0, %s113
      %s130 = sphi 0, %s114
    $region4: #{tpu_custom_call.1} parent=1 // loop_header_branch
      %20 = sbr.rel (%p18) target = $region8
    $region5: #{tpu_custom_call.1} parent=1 // loop_body
      %s22 = ssub.s32 %s17, 1
      %s23 = ssub.s32 %s17, 2
      %s33 = sadd.s32 1, %s26
      %p34 = scmp.ge.s32.totalorder %s33, 1
      %s35 = scalar_select %p34, 0, %s33
      %s36 = sadd.s32 1, %s25
      %s37 = scalar_select %p34, %s36, %s25
      %p38 = scmp.ge.s32.totalorder %s37, 2
      %s39 = scalar_select %p38, 0, %s37
      %s40 = sadd.s32 1, %s24
      %s41 = scalar_select %p38, %s40, %s24
      %p42 = scmp.ge.s32.totalorder %s41, 1
      %s43 = scalar_select %p42, 0, %s41
      %s44 = sadd.s32 %s24, %s26
      %s45 = sadd.s32 %s43, %s35
      %s46 = ssub.s32 %s25, %s39
      %s47 = ssub.s32 %s44, %s45
      %s48 = sor.u32 %s46, %s47
      %p49 = scmp.eq.s32.totalorder %s48, 0
      %s51 = sadd.s32 %s50, 1
      %s52 = scalar_select %p49, %s50, %s51
      %p55 = pneg %p49
      %p56 = scmp.eq.s32.totalorder %s17, 1
      %p57 = por %p55, %p56
      %p58 = scmp.ne.s32.totalorder %s50, %s53
      %p59 = scmp.eq.s32.totalorder %s17, 0
      %p60 = por %p58, %p59
      %p61 = scmp.ne.s32.totalorder %s50, %s53
      %p62 = scmp.eq.s32.totalorder %s22, 1
      %p63 = por %p61, %p62
      %p64 = scmp.ne.s32.totalorder %s53, %s54
      %p65 = scmp.eq.s32.totalorder %s22, 0
      %p66 = por %p64, %p65
      %p67 = scmp.ne.s32.totalorder %s53, %s54
      %p68 = scmp.eq.s32.totalorder %s23, 1
      %p69 = por %p67, %p68
      %p71 = scmp.ne.s32.totalorder %s54, %s70
      %p72 = scmp.eq.s32.totalorder %s23, 0
      %p73 = por %p71, %p72
      %s74 = sadd.s32 %s24, %s26
      %s75 = sadd.s32 %s43, %s35
      %s76 = ssub.s32 %s25, %s39
      %s77 = ssub.s32 %s74, %s75
      %s78 = sor.u32 %s76, %s77
      %p79 = scmp.eq.s32.totalorder %s78, 0
      %s81 = sadd.s32 %s80, 1
      %s82 = scalar_select %p79, %s80, %s81
      %p85 = pneg %p79
      %p86 = scmp.eq.s32.totalorder %s17, 1
      %p87 = por %p85, %p86
      %p88 = scmp.ne.s32.totalorder %s80, %s83
      %p89 = scmp.eq.s32.totalorder %s17, 0
      %p90 = por %p88, %p89
      %p91 = scmp.ne.s32.totalorder %s80, %s83
      %p92 = scmp.eq.s32.totalorder %s22, 1
      %p93 = por %p91, %p92
      %p94 = scmp.ne.s32.totalorder %s83, %s84
      %p95 = scmp.eq.s32.totalorder %s22, 0
      %p96 = por %p94, %p95
      %p97 = scmp.ne.s32.totalorder %s83, %s84
      %p98 = scmp.eq.s32.totalorder %s23, 1
      %p99 = por %p97, %p98
      %p101 = scmp.ne.s32.totalorder %s84, %s100
      %p102 = scmp.eq.s32.totalorder %s23, 0
      %p103 = por %p101, %p102
      %s104 = smul.u32 %s24, 2
      %s105 = sadd.s32 %s104, %s25
      %s106 = smul.u32 %s43, 2
      %s107 = sadd.s32 %s106, %s39
      %s108 = ssub.s32 %s105, %s107
      %p109 = scmp.eq.s32.totalorder %s108, 0
      %s111 = sadd.s32 %s110, 1
      %s112 = scalar_select %p109, %s110, %s111
      %p115 = pneg %p109
      %p116 = scmp.eq.s32.totalorder %s17, 1
      %p117 = por %p115, %p116
      %p118 = scmp.ne.s32.totalorder %s110, %s113
      %p119 = scmp.eq.s32.totalorder %s17, 0
      %p120 = por %p118, %p119
      %p121 = scmp.ne.s32.totalorder %s110, %s113
      %p122 = scmp.eq.s32.totalorder %s22, 1
      %p123 = por %p121, %p122
      %p124 = scmp.ne.s32.totalorder %s113, %s114
      %p125 = scmp.eq.s32.totalorder %s22, 0
      %p126 = por %p124, %p125
      %p127 = scmp.ne.s32.totalorder %s113, %s114
      %p128 = scmp.eq.s32.totalorder %s23, 1
      %p129 = por %p127, %p128
      %p131 = scmp.ne.s32.totalorder %s114, %s130
      %p132 = scmp.eq.s32.totalorder %s23, 0
      %p133 = por %p131, %p132
      %p134 = scmp.le.s32.totalorder 1, %s17
      %p135 = scmp.lt.s32.totalorder %s17, 3
      %p136 = pnand %p134, %p135
      %p137 = pneg %p136
      // Predicated region
      $region9: #{tpu_custom_call.1} parent=5 // pred_check
        _
      $region10: #{tpu_custom_call.1} parent=5 // pred_check_branch
        %139 = sbr.rel (%p136) target = $region12
      $region11: #{tpu_custom_call.1} parent=5 // pred_region
        %s140 = ssub.s32 %s17, 1
      $region12: #{tpu_custom_call.1} parent=5 // pred_fallthru
        _
      %p141 = scmp.lt.s32.totalorder %s17, 2
      // Predicated region
      $region13: #{tpu_custom_call.1} parent=5 // pred_check
        %p142 = pneg %p141
      $region14: #{tpu_custom_call.1} parent=5 // pred_check_branch
        %144 = sbr.rel (%p142) target = $region16
      $region15: #{tpu_custom_call.1} parent=5 // pred_region
        // Predicated region
        $region17: #{tpu_custom_call.1} parent=15 // pred_check
          %p145 = pneg %p60
        $region18: #{tpu_custom_call.1} parent=15 // pred_check_branch
          %147 = sbr.rel (%p145) target = $region20
        $region19: #{tpu_custom_call.1} parent=15 // pred_region
          %s148 = sand.u32 %s50, 1
          %s149 = scalar_lea.sflag [#allocation3], %s148
          %s150 = sand.u32 %s50, 1
          %s151 = smul.addr %s150, 8
          %s152 = scalar_lea.vmem [#allocation2], %s151
          %s153 = sadd.s32 %s24, %s26
          %s155 = ssub.s32 128, 128
          %156 = vsyncadd %s149, %s155
          %s157 = sadd.s32 %s153, %s25
          %s158 = smul.addr %s157, 128
          %s159 = scalar_lea.hbm %s0, %s158
          %s161 = sshll.u32 %s152, 4
          %s162 = int_to_ptr.vmem [resolvable:$true] %s161
          %164 = dma.hbm_to_vmem [thread:$0]  %s159, 128, %s162, %s149
        $region20: #{tpu_custom_call.1} parent=15 // pred_fallthru
          _
        // Predicated region
        $region21: #{tpu_custom_call.1} parent=15 // pred_check
          %p165 = pneg %p90
        $region22: #{tpu_custom_call.1} parent=15 // pred_check_branch
          %167 = sbr.rel (%p165) target = $region24
        $region23: #{tpu_custom_call.1} parent=15 // pred_region
          %s168 = sand.u32 %s80, 1
          %s169 = scalar_lea.sflag [#allocation6], %s168
          %s170 = sand.u32 %s80, 1
          %s171 = smul.addr %s170, 8
          %s172 = scalar_lea.vmem [#allocation5], %s171
          %s173 = sadd.s32 %s24, %s26
          %s175 = ssub.s32 128, 128
          %176 = vsyncadd %s169, %s175
          %s177 = sadd.s32 %s173, %s25
          %s178 = smul.addr %s177, 128
          %s179 = scalar_lea.hbm %s1, %s178
          %s181 = sshll.u32 %s172, 4
          %s182 = int_to_ptr.vmem [resolvable:$true] %s181
          %184 = dma.hbm_to_vmem [thread:$0]  %s179, 128, %s182, %s169
        $region24: #{tpu_custom_call.1} parent=15 // pred_fallthru
          _
      $region16: #{tpu_custom_call.1} parent=5 // pred_fallthru
        _
      %p185 = scmp.le.s32.totalorder 1, %s17
      %p186 = scmp.lt.s32.totalorder %s17, 3
      %p187 = pnand %p185, %p186
      %p188 = pneg %p187
      // Predicated region
      $region25: #{tpu_custom_call.1} parent=5 // pred_check
        _
      $region26: #{tpu_custom_call.1} parent=5 // pred_check_branch
        %190 = sbr.rel (%p187) target = $region28
      $region27: #{tpu_custom_call.1} parent=5 // pred_region
        %s191 = ssub.s32 %s17, 1
        %s192 = sand.u32 %s53, 1
        %s193 = scalar_lea.sflag [#allocation3], %s192
        %s194 = sand.u32 %s53, 1
        %s195 = smul.addr %s194, 8
        %s196 = scalar_lea.vmem [#allocation2], %s195
        // Predicated region
        $region29: #{tpu_custom_call.1} parent=27 // pred_check
          %p197 = pneg %p66
        $region30: #{tpu_custom_call.1} parent=27 // pred_check_branch
          %199 = sbr.rel (%p197) target = $region32
        $region31: #{tpu_custom_call.1} parent=27 // pred_region
          %200 = dma.done %s193, 128
        $region32: #{tpu_custom_call.1} parent=27 // pred_fallthru
          _
        %s201 = sand.u32 %s83, 1
        %s202 = scalar_lea.sflag [#allocation6], %s201
        %s203 = sand.u32 %s83, 1
        %s204 = smul.addr %s203, 8
        %s205 = scalar_lea.vmem [#allocation5], %s204
        // Predicated region
        $region33: #{tpu_custom_call.1} parent=27 // pred_check
          %p206 = pneg %p96
        $region34: #{tpu_custom_call.1} parent=27 // pred_check_branch
          %208 = sbr.rel (%p206) target = $region36
        $region35: #{tpu_custom_call.1} parent=27 // pred_region
          %209 = dma.done %s202, 128
        $region36: #{tpu_custom_call.1} parent=27 // pred_fallthru
          _
        %s210 = sand.u32 %s53, 1
        %s211 = scalar_lea.sflag [#allocation3], %s210
        %s212 = sand.u32 %s53, 1
        %s213 = smul.addr %s212, 8
        %s214 = scalar_lea.vmem [#allocation2], %s213
        %p215 = pneg %p66
        %p216 = pneg %p63
        %s217 = sand.u32 %s83, 1
        %s218 = scalar_lea.sflag [#allocation6], %s217
        %s219 = sand.u32 %s83, 1
        %s220 = smul.addr %s219, 8
        %s221 = scalar_lea.vmem [#allocation5], %s220
        %p222 = pneg %p96
        %p223 = pneg %p93
        %p224 = pneg %p126
        %p225 = pneg %p123
        %s226 = sand.u32 %s113, 1
        %s227 = scalar_lea.sflag [#allocation4], %s226
        %s228 = sand.u32 %s113, 1
        %s229 = smul.addr %s228, 16
        %s230 = scalar_lea.vmem [#allocation7], %s229
        %s231 = sadd.s32 %s27, %s29
        %s232 = sadd.s32 %s27, %s29
        %s233 = smul.u32 %s27, 2
        %s234 = sadd.s32 %s233, %s28
        %p235 = scmp.eq.s32.totalorder %s29, 0
        // Predicated region
        $region37: #{tpu_custom_call.1} parent=27 // pred_check
          %p236 = pneg %p235
        $region38: #{tpu_custom_call.1} parent=27 // pred_check_branch
          %238 = sbr.rel (%p236) target = $region40
        $region39: #{tpu_custom_call.1} parent=27 // pred_region
          %239 = vst [vmem:[%s230] sm:$0xff] 0.0
          %240 = vst [vmem:[%s230 + $0x8] sm:$0xff] 0.0
        $region40: #{tpu_custom_call.1} parent=27 // pred_fallthru
          _
        %v241 = vld [vmem:[%s196] sm:$0xff]
        %v242 = vld [vmem:[%s205] sm:$0xff]
        %v243 = vmul.f32 %v242, %v241
        %v244 = vadd.f32 %v242, %v241
        %v245 = vld [vmem:[%s230] sm:$0xff]
        %v246 = vadd.f32 %v245, %v243
        %247 = vst [vmem:[%s230] sm:$0xff] %v246
        %s248 = scalar_lea.vmem %s230, 8 [#allocation7]
        %v249 = vld [vmem:[%s248] sm:$0xff]
        %v250 = vadd.f32 %v249, %v244
        %251 = vst [vmem:[%s248] sm:$0xff] %v250
        %s252 = sand.u32 %s113, 1
        %s253 = scalar_lea.sflag [#allocation4], %s252
        %s254 = sand.u32 %s113, 1
        %s255 = smul.addr %s254, 16
        %s256 = scalar_lea.vmem [#allocation7], %s255
        // Predicated region
        $region41: #{tpu_custom_call.1} parent=27 // pred_check
          %p257 = pneg %p123
        $region42: #{tpu_custom_call.1} parent=27 // pred_check_branch
          %259 = sbr.rel (%p257) target = $region44
        $region43: #{tpu_custom_call.1} parent=27 // pred_region
          %s260 = smul.u32 %s27, 2
          %s261 = sadd.s32 %s260, %s28
          %s263 = ssub.s32 256, 256
          %264 = vsyncadd %s253, %s263
          %s265 = smul.addr %s261, 2
          %s266 = smul.addr %s265, 128
          %s267 = scalar_lea.hbm %s2, %s266
          %s268 = sshll.u32 %s256, 4
          %s269 = int_to_ptr.vmem [resolvable:$true] %s268
          %274 = dma.vmem_to_hbm [thread:$0]  %s269, 256, %s267, %s253, 128, 128, 8
        $region44: #{tpu_custom_call.1} parent=27 // pred_fallthru
          _
      $region28: #{tpu_custom_call.1} parent=5 // pred_fallthru
        _
      %p275 = scmp.le.s32.totalorder 2, %s17
      // Predicated region
      $region45: #{tpu_custom_call.1} parent=5 // pred_check
        %p276 = pneg %p275
      $region46: #{tpu_custom_call.1} parent=5 // pred_check_branch
        %278 = sbr.rel (%p276) target = $region48
      $region47: #{tpu_custom_call.1} parent=5 // pred_region
        %s279 = ssub.s32 %s17, 2
        // Predicated region
        $region49: #{tpu_custom_call.1} parent=47 // pred_check
          %p280 = pneg %p129
        $region50: #{tpu_custom_call.1} parent=47 // pred_check_branch
          %282 = sbr.rel (%p280) target = $region52
        $region51: #{tpu_custom_call.1} parent=47 // pred_region
          %s283 = sand.u32 %s114, 1
          %s284 = scalar_lea.sflag [#allocation4], %s283
          %s285 = sand.u32 %s114, 1
          %s286 = smul.addr %s285, 16
          %s287 = scalar_lea.vmem [#allocation7], %s286
          %288 = dma.done %s284, 256
        $region52: #{tpu_custom_call.1} parent=47 // pred_fallthru
          _
      $region48: #{tpu_custom_call.1} parent=5 // pred_fallthru
        _
    $region6: #{tpu_custom_call.1} parent=1 // loop_footer
      %s21 = sadd.s32 1, %s17
    $region7: #{tpu_custom_call.1} parent=1 // loop_footer_branch
      %16 = sbr.rel target = $region3
    $region8: #{tpu_custom_call.1} parent=1 // loop_exit
      _
    %289 = vsyncpa [#allocation3], 1
    %s290 = scalar_lea.sflag [#allocation3], 1
    %291 = vsyncpa %s290, 1
    %292 = vsyncpa [#allocation6], 1
    %s293 = scalar_lea.sflag [#allocation6], 1
    %294 = vsyncpa %s293, 1
    %295 = vsyncpa [#allocation4], 1
    %s296 = scalar_lea.sflag [#allocation4], 1
    %297 = vsyncpa %s296, 1

</llo_original>
